<compile_context>
chip_gen: v7x
topology: tpu7x:2x2x1
jax: 0.10.0
libtpu: 0.0.40
codegen_flags: <defaults>
</compile_context>

<pallas_src>
import functools

import jax
import jax.numpy as jnp
from jax.experimental import pallas as pl
from jax.experimental.pallas import tpu as pltpu


# -----------------------------------------------------------------------------
# generation-aware VMEM budgeting helpers
# -----------------------------------------------------------------------------
def _vmem_capacity_bytes():
    try:
        return int(pltpu.get_tpu_info().vmem_capacity_bytes)
    except Exception:
        return 64 * 1024 * 1024  # v7x-safe fallback


def _vmem_limit_bytes(cap):
    # Explicit scoped-VMEM limit: above the v5e (16 MiB) / v6e-v7x (32 MiB)
    # defaults, but well under the physical capacity of any generation.
    return int(min(cap * 3 // 4, 100 * 1024 * 1024))


def _lane_tiling(lane_dim, lane_cap):
    """Pick (lane_tile, n_tiles, padded_lane_dim) for a streaming reduction.

    lane_tile is either the full (possibly padded) lane dim, or a multiple of
    128 that exactly tiles the (possibly padded) lane dim.
    """
    if lane_dim <= lane_cap:
        return lane_dim, 1, lane_dim
    cap_tile = max(128, (lane_cap // 128) * 128)
    t = cap_tile
    while t >= 128:
        if lane_dim % t == 0:
            return t, lane_dim // t, lane_dim
        t -= 128
    # No exact divisor <= cap: pad the lane dim with zeros (safe: zeros add 0
    # to |.| sums and never trip the depth_reg threshold).
    n = -(-lane_dim // cap_tile)
    return cap_tile, n, n * cap_tile


def _pick_h_tile(H, W, budget_bytes):
    """Largest multiple-of-8 divisor of H whose (depth + flow, double-buffered)
    blocks fit budget_bytes; full H if H is not a multiple of 8."""
    if H % 8 != 0:
        return H
    t = H
    while t >= 8:
        if H % t == 0 and t % 8 == 0 and 24 * t * W <= budget_bytes:
            return t
        t -= 8
    return 8


# -----------------------------------------------------------------------------
# Kernel 1: depth warping flow (BackprojectDepth + cam_T_cam + Project3DSimple)
# -----------------------------------------------------------------------------
def _flow_kernel(mats_ref, depth_ref, flow_ref, *, H_tile, W):
    """Grid: (B, H // H_tile).

    mats_ref  : SMEM f32[(B*64,)] -- per batch: [inv_K(16), T(16), K_src(16), K_near(16)]
    depth_ref : VMEM f32[H_tile, W]     (batch dim squeezed by BlockSpec)
    flow_ref  : VMEM f32[2, H_tile, W]  (dx, dy)
    """
    b = pl.program_id(0)
    h = pl.program_id(1)
    base = b * 64

    def m(off, r, c):  # scalar matrix entry from SMEM
        return mats_ref[base + off + 4 * r + c]

    # Pixel grid generated in-kernel: dense (H_tile, W) iotas, no % or //.
    col = jax.lax.broadcasted_iota(jnp.int32, (H_tile, W), 1)
    row = jax.lax.broadcasted_iota(jnp.int32, (H_tile, W), 0)
    px = col.astype(jnp.float32)
    py = (row + h * H_tile).astype(jnp.float32)
    eps = 1e-7

    depth = depth_ref[...]  # (H_tile, W)

    # BackprojectDepth: cam = (inv_K[:3,:3] @ [px,py,1]) * depth ; w = 1
    cx = (m(0, 0, 0) * px + m(0, 0, 1) * py + m(0, 0, 2)) * depth
    cy = (m(0, 1, 0) * px + m(0, 1, 1) * py + m(0, 1, 2)) * depth
    cz = (m(0, 2, 0) * px + m(0, 2, 1) * py + m(0, 2, 2)) * depth

    # Rigid transform: near = cam_T_cam @ [cx, cy, cz, 1]
    nx = m(16, 0, 0) * cx + m(16, 0, 1) * cy + m(16, 0, 2) * cz + m(16, 0, 3)
    ny = m(16, 1, 0) * cx + m(16, 1, 1) * cy + m(16, 1, 2) * cz + m(16, 1, 3)
    nz = m(16, 2, 0) * cx + m(16, 2, 1) * cy + m(16, 2, 2) * cz + m(16, 2, 3)

    def project(off, X, Y, Z):  # Project3DSimple (K[:3,:3] @ P, persp divide)
        Px = m(off, 0, 0) * X + m(off, 0, 1) * Y + m(off, 0, 2) * Z
        Py = m(off, 1, 0) * X + m(off, 1, 1) * Y + m(off, 1, 2) * Z
        Pz = m(off, 2, 0) * X + m(off, 2, 1) * Y + m(off, 2, 2) * Z + eps
        inv0 = pl.reciprocal(Pz, approx=True)      # EUP slot
        inv = inv0 * (2.0 - Pz * inv0)             # one Newton-Raphson step (VPU)
        return Px * inv, Py * inv

    sx, sy = project(32, cx, cy, cz)   # src_pix_coords      (K_tgt, 0)
    tx, ty = project(48, nx, ny, nz)   # src_pix_coords_near (K_tgt, frame_id)

    flow_ref[0] = tx - sx
    flow_ref[1] = ty - sy


def depth_warping_flow(unidepth, inv_K_src, cam_T_cam, K_src, K_near):
    """unidepth: (B,1,H,W); matrices: (B,4,4). Returns flow (B,2,H,W).

    Output stays channel-major (lane-dense); PyTorch's (B,H,W,2) convention is
    a deferred transpose if ever needed downstream.
    """
    B, _, H, W = unidepth.shape
    depth = unidepth.reshape(B, H, W).astype(jnp.float32)

    mats = jnp.concatenate(
        [
            inv_K_src.reshape(B, 16),
            cam_T_cam.reshape(B, 16),
            K_src.reshape(B, 16),
            K_near.reshape(B, 16),
        ],
        axis=1,
    ).reshape(-1).astype(jnp.float32)  # (B*64,)

    cap = _vmem_capacity_bytes()
    H_tile = _pick_h_tile(H, W, cap // 4)
    n_h = H // H_tile if H % H_tile == 0 else 1
    if n_h * H_tile != H:
        H_tile, n_h = H, 1  # safety fallback (shouldn't trigger)

    flow = pl.pallas_call(
        functools.partial(_flow_kernel, H_tile=H_tile, W=W),
        out_shape=jax.ShapeDtypeStruct((B, 2, H, W), jnp.float32),
        grid=(B, n_h),
        in_specs=[
            pl.BlockSpec(memory_space=pltpu.MemorySpace.SMEM),            # mats (whole)
            pl.BlockSpec((None, H_tile, W), lambda b, h: (b, h, 0)),      # depth
        ],
        out_specs=pl.BlockSpec((None, 2, H_tile, W), lambda b, h: (b, 0, h, 0)),
        compiler_params=pltpu.CompilerParams(
            dimension_semantics=("parallel", "parallel"),
            vmem_limit_bytes=_vmem_limit_bytes(cap),
        ),
    )(mats, depth)
    return flow


# -----------------------------------------------------------------------------
# Kernel 2: fused streaming losses
#   per-frame mean(|pred-tgt|) or mean((pred-tgt)^2)   (reconstruction loss)
#   + masked |depth_gauss - unidepth| sum & count       (depth regularization)
# all in ONE lane-tiled launch with VMEM vector accumulators.
# -----------------------------------------------------------------------------
def _fused_loss_kernel(*refs, loss_type, n_frames, with_depth_reg, ratio, n_in):
    in_refs = refs[:n_in]              # pred0, tgt0, ..., [depth_gauss, unidepth]
    out_ref = refs[n_in]               # SMEM (1, n_acc) of raw sums
    acc_refs = refs[n_in + 1:]         # VMEM block-shaped accumulators
    r = pl.program_id(0)

    @pl.when(r == 0)
    def _():
        for a in acc_refs:
            a[...] = jnp.zeros_like(a)

    for f in range(n_frames):
        d = in_refs[2 * f][...] - in_refs[2 * f + 1][...]
        v = jnp.abs(d) if loss_type == "l1" else d * d
        acc_refs[f][...] += v          # pure VPU add; no per-tile cross-lane reduce

    if with_depth_reg:
        dg = in_refs[2 * n_frames][...]
        ud = in_refs[2 * n_frames + 1][...]
        err = jnp.abs(dg - ud)
        mask = (err > ud * ratio).astype(jnp.float32)
        acc_refs[n_frames][...] += err * mask
        acc_refs[n_frames + 1][...] += mask

    @pl.when(r == pl.num_programs(0) - 1)
    def _():
        for i, a in enumerate(acc_refs):
            out_ref[0, i] = jnp.sum(a[...])   # single final cross-lane reduce


def fused_streaming_losses(preds, tgts, loss_type, depth_gauss, unidepth, ratio):
    """preds/tgts: lists of (B,C,H,W). depth_gauss/unidepth: (B,1,H,W) or None.

    Returns (recon_means: (F,) or None, depth_reg: scalar or None).
    """
    n_frames = len(preds)
    with_depth_reg = depth_gauss is not None
    assert n_frames > 0 or with_depth_reg

    if n_frames > 0:
        B, C, H, W = preds[0].shape
    else:
        B, C, H, W = unidepth.shape[0], 1, unidepth.shape[2], unidepth.shape[3]
    HW = H * W

    # Sublane packing: (rows, HW) -> (rows*8, HW/8) so vregs are full.
    fold = 8 if HW % 8 == 0 else 1
    lane_dim = HW // fold
    rows_c = B * C * fold
    rows_d = (B * fold) if with_depth_reg else 0

    cap = _vmem_capacity_bytes()
    # bytes of VMEM needed per lane column: double-buffered input blocks plus
    # single-buffered accumulators.
    per_lane = 4 * (2 * (2 * n_frames * rows_c + 2 * rows_d)
                    + (n_frames * rows_c + 2 * rows_d))
    lane_cap = max(128, (cap // 3) // max(per_lane, 1))
    lane_tile, n_tiles, lane_pad = _lane_tiling(lane_dim, lane_cap)

    def prep(x, rows_unfolded):
        a = x.reshape(rows_unfolded * fold, lane_dim).astype(jnp.float32)
        if lane_pad != lane_dim:
            a = jnp.pad(a, ((0, 0), (0, lane_pad - lane_dim)))
        return a

    args, in_specs = [], []
    for p, t in zip(preds, tgts):
        args += [prep(p, B * C), prep(t, B * C)]
        in_specs += [pl.BlockSpec((rows_c, lane_tile), lambda r: (0, r))] * 2
    if with_depth_reg:
        args += [prep(depth_gauss, B), prep(unidepth, B)]
        in_specs += [pl.BlockSpec((B * fold, lane_tile), lambda r: (0, r))] * 2

    n_in = len(args)
    n_acc = n_frames + (2 if with_depth_reg else 0)
    scratch = [pltpu.VMEM((rows_c, lane_tile), jnp.float32) for _ in range(n_frames)]
    if with_depth_reg:
        scratch += [pltpu.VMEM((B * fold, lane_tile), jnp.float32)] * 2

    out = pl.pallas_call(
        functools.partial(
            _fused_loss_kernel,
            loss_type=loss_type,
            n_frames=n_frames,
            with_depth_reg=with_depth_reg,
            ratio=ratio,
            n_in=n_in,
        ),
        out_shape=jax.ShapeDtypeStruct((1, n_acc), jnp.float32),
        grid=(n_tiles,),
        in_specs=in_specs,
        out_specs=pl.BlockSpec(memory_space=pltpu.MemorySpace.SMEM),
        scratch_shapes=scratch,
        compiler_params=pltpu.CompilerParams(
            dimension_semantics=("arbitrary",),
            vmem_limit_bytes=_vmem_limit_bytes(cap),
        ),
    )(*args)

    sums = out[0]
    recon_means = None
    if n_frames > 0:
        recon_means = sums[:n_frames] / float(B * C * HW)
    depth_reg = None
    if with_depth_reg:
        s, cnt = sums[n_frames], sums[n_frames + 1]
        # torch: mean(error[big]) if len(big) > 0 else 0
        depth_reg = jnp.where(cnt > 0, s / jnp.maximum(cnt, 1.0), 0.0)
    return recon_means, depth_reg


# -----------------------------------------------------------------------------
# Trainer.compute_losses / forward (glue in plain JAX)
# -----------------------------------------------------------------------------
DEFAULT_CFG = dict(
    gaussian_rendering=True,
    frame_ids=(0, 1, 2),
    mse_weight=1.0,
    mse_type="l1",            # 'l1' | 'l2'
    ssim_weight=0.0,          # TODO(synk): SSIM module disabled (no conv windows / checkpoint here)
    window_weight=0.0,        # TODO(synk): RAFT bidirectional flow has no Pallas equivalent here
    gauss_scale_weight=0.0,   # TODO(synk): torch.quantile-based reg (sort) not translated
    predict_offset=False,
    depth_reg_weight=1.0,
    depth_reg_ratio=0.1,
    pad_border_aug=0,
    handle_dynamic_by_mask=False,
    handle_dynamic_by_flow=False,
)


def compute_losses(cfg, inputs, outputs):
    losses = {}
    total_loss = 0.0
    assert cfg["gaussian_rendering"]

    frame_ids = cfg["frame_ids"]
    # camera_flow is only consumed by the dynamic-handling branches; with both
    # flags off it is dead compute in the PyTorch reference, so skip it here.
    need_camera_flow = cfg["handle_dynamic_by_mask"] or cfg["handle_dynamic_by_flow"]

    preds, tgts = [], []
    for frame_id in frame_ids:
        if frame_id != 0 and need_camera_flow:
            # TODO(synk): dynamic-object masking (forward_flow_warp / RAFT) not
            # translated; camera_flow is computed and stored but its consumers
            # are unavailable here.
            camera_flow = depth_warping_flow(
                outputs["unidepth"],
                inputs[("inv_K_src", 0)],
                outputs[("cam_T_cam", 0, frame_id)],
                inputs[("K_tgt", 0)],
                inputs[("K_tgt", frame_id)],
            )
            outputs[("camera_flow", frame_id)] = jax.lax.stop_gradient(camera_flow)
        # bg_mask = 1 - zeros_like(fg_mask) == 1 -> identity multiply removed;
        # alias the originals so the outputs dict keeps the same entries.
        pred = outputs[("color_gauss", frame_id, 0)]
        tgt = inputs[("color", frame_id, 0)]
        outputs[("color_loss_pred", frame_id, 0)] = pred
        outputs[("color_loss_gt", frame_id, 0)] = tgt
        preds.append(pred)
        tgts.append(tgt)

    need_recon = cfg["mse_weight"] > 0
    need_depth_reg = cfg["depth_reg_weight"] > 0

    recon_means = depth_reg = None
    if need_recon or need_depth_reg:
        recon_means, depth_reg = fused_streaming_losses(
            preds if need_recon else [],
            tgts if need_recon else [],
            cfg["mse_type"],
            outputs[("depth_gauss", 0, 0)] if need_depth_reg else None,
            jax.lax.stop_gradient(outputs["unidepth"]) if need_depth_reg else None,
            cfg["depth_reg_ratio"],
        )

    if need_depth_reg:
        losses["loss/depth_reg"] = depth_reg
        total_loss += cfg["depth_reg_weight"] * depth_reg

    rec_loss = 0.0
    if need_recon:
        # PyTorch overwrites losses['loss/mse'] per frame; the last one survives.
        losses["loss/mse"] = recon_means[-1]
        rec_loss = cfg["mse_weight"] * jnp.sum(recon_means) / len(frame_ids)
    # cfg['ssim_weight'] == 0 -> SSIM branch skipped (matches PyTorch control flow)

    losses["loss/rec"] = rec_loss
    total_loss += rec_loss
    losses["loss/total"] = total_loss
    return losses


def synthetic_gaussian_predictor(cfg, inputs, key):
    """TODO(synk): GaussianPredictor is an external network; outputs are
    synthesized deterministically with the shapes Trainer.compute_losses needs."""
    B, _, H, W = inputs[("color", 0, 0)].shape
    k1, k2, *kc = jax.random.split(key, 2 + len(cfg["frame_ids"]))
    outputs = {}
    unidepth = 1.0 + 4.0 * jax.random.uniform(k1, (B, 1, H, W), jnp.float32)
    outputs["unidepth"] = unidepth
    outputs[("depth_gauss", 0, 0)] = unidepth + 0.3 * jax.random.normal(
        k2, (B, 1, H, W), jnp.float32
    )
    for i, fid in enumerate(cfg["frame_ids"]):
        outputs[("color_gauss", fid, 0)] = jax.random.uniform(
            kc[i], (B, 3, H, W), jnp.float32
        )
        if fid != 0:
            T = jnp.eye(4, dtype=jnp.float32)
            T = (
                T.at[0, 3].set(0.05 * fid)
                .at[1, 3].set(-0.02 * fid)
                .at[2, 3].set(0.01 * fid)
            )
            outputs[("cam_T_cam", 0, fid)] = jnp.broadcast_to(T, (B, 4, 4))
    return outputs


def trainer_forward(cfg, inputs, key):
    outputs = synthetic_gaussian_predictor(cfg, inputs, key)
    losses = compute_losses(cfg, inputs, outputs)
    return losses, outputs


# -----------------------------------------------------------------------------
# plain-JAX references (correctness checks only)
# -----------------------------------------------------------------------------
def _flow_reference(unidepth, inv_K, T, K_src, K_near):
    B, _, H, W = unidepth.shape
    ys, xs = jnp.meshgrid(
        jnp.arange(H, dtype=jnp.float32),
        jnp.arange(W, dtype=jnp.float32),
        indexing="ij",
    )
    pix = jnp.stack([xs, ys, jnp.ones_like(xs)], 0).reshape(3, -1)   # (3, HW)
    cam = jnp.einsum("bij,jn->bin", inv_K[:, :3, :3], pix)
    cam = cam * unidepth.reshape(B, 1, -1)
    cam_h = jnp.concatenate([cam, jnp.ones((B, 1, H * W), jnp.float32)], 1)
    near = jnp.einsum("bij,bjn->bin", T, cam_h)[:, :3]

    def proj(K, P):
        q = jnp.einsum("bij,bjn->bin", K[:, :3, :3], P)
        return q[:, :2] / (q[:, 2:3] + 1e-7)

    flow = proj(K_near, near) - proj(K_src, cam)
    return flow.reshape(B, 2, H, W)


# -----------------------------------------------------------------------------
# main
# -----------------------------------------------------------------------------
if __name__ == "__main__":
    cfg = dict(DEFAULT_CFG)
    key = jax.random.PRNGKey(0)
    k_in, k_model, *k_colors = jax.random.split(key, 3 + len(cfg["frame_ids"]))

    B, C, H, W = 2, 3, 16, 16

    # Intrinsics (4x4, only 3x3 used) and inverse.
    K = jnp.array(
        [[W * 1.0, 0.0, W / 2.0, 0.0],
         [0.0, H * 1.0, H / 2.0, 0.0],
         [0.0, 0.0, 1.0, 0.0],
         [0.0, 0.0, 0.0, 1.0]],
        dtype=jnp.float32,
    )
    inv_K = jnp.linalg.inv(K)

    inputs = {}
    for i, fid in enumerate(cfg["frame_ids"]):
        inputs[("color", fid, 0)] = jax.random.uniform(
            k_colors[i], (B, C, H, W), jnp.float32
        )
        inputs[("K_tgt", fid)] = jnp.broadcast_to(K, (B, 4, 4))
    inputs[("color_aug", 0, 0)] = inputs[("color", 0, 0)]
    inputs[("inv_K_src", 0)] = jnp.broadcast_to(inv_K, (B, 4, 4))
    inputs[("fg_mask", 0)] = (
        jax.random.uniform(k_in, (B, 1, H, W), jnp.float32) > 0.7
    ).astype(jnp.float32)

    losses, outputs = trainer_forward(cfg, inputs, k_model)
    jax.block_until_ready(losses["loss/total"])

    # --- correctness: fused loss kernel vs plain JAX ------------------------
    ref_means = jnp.stack(
        [
            jnp.mean(jnp.abs(outputs[("color_gauss", fid, 0)] - inputs[("color", fid, 0)]))
            for fid in cfg["frame_ids"]
        ]
    )
    ud = outputs["unidepth"]
    err = jnp.abs(outputs[("depth_gauss", 0, 0)] - ud)
    msk = (err > ud * cfg["depth_reg_ratio"]).astype(jnp.float32)
    ref_dr = jnp.where(
        jnp.sum(msk) > 0, jnp.sum(err * msk) / jnp.maximum(jnp.sum(msk), 1.0), 0.0
    )
    ref_rec = cfg["mse_weight"] * jnp.sum(ref_means) / len(cfg["frame_ids"])
    assert jnp.allclose(losses["loss/mse"], ref_means[-1], rtol=1e-3, atol=1e-3)
    assert jnp.allclose(losses["loss/rec"], ref_rec, rtol=1e-3, atol=1e-3)
    assert jnp.allclose(losses["loss/depth_reg"], ref_dr, rtol=1e-3, atol=1e-3)

    # --- correctness: flow kernel (skipped in the loss path for this config,
    # so exercise it standalone) ---------------------------------------------
    flow = depth_warping_flow(
        outputs["unidepth"],
        inputs[("inv_K_src", 0)],
        outputs[("cam_T_cam", 0, 1)],
        inputs[("K_tgt", 0)],
        inputs[("K_tgt", 1)],
    )
    jax.block_until_ready(flow)
    flow_ref = _flow_reference(
        outputs["unidepth"],
        inputs[("inv_K_src", 0)],
        outputs[("cam_T_cam", 0, 1)],
        inputs[("K_tgt", 0)],
        inputs[("K_tgt", 1)],
    )
    assert bool(jnp.all(jnp.isfinite(flow)))
    assert jnp.allclose(flow, flow_ref, rtol=1e-3, atol=5e-3)

    assert bool(jnp.isfinite(losses["loss/total"]))
    assert bool(jnp.isfinite(losses["loss/rec"]))
    assert bool(jnp.isfinite(losses["loss/depth_reg"]))
    print("KERNEL_OK")
</pallas_src>

<mosaic_0001>
module attributes {stable_mosaic.version = 11 : i64} {
  func.func @_fused_loss_kernel(%arg0: i32, %arg1: memref<48x32xf32, #tpu.memory_space<vmem>>, %arg2: memref<48x32xf32, #tpu.memory_space<vmem>>, %arg3: memref<48x32xf32, #tpu.memory_space<vmem>>, %arg4: memref<48x32xf32, #tpu.memory_space<vmem>>, %arg5: memref<48x32xf32, #tpu.memory_space<vmem>>, %arg6: memref<48x32xf32, #tpu.memory_space<vmem>>, %arg7: memref<16x32xf32, #tpu.memory_space<vmem>>, %arg8: memref<16x32xf32, #tpu.memory_space<vmem>>, %arg9: memref<1x5xf32, #tpu.memory_space<smem>>, %arg10: memref<48x32xf32, #tpu.memory_space<vmem>>, %arg11: memref<48x32xf32, #tpu.memory_space<vmem>>, %arg12: memref<48x32xf32, #tpu.memory_space<vmem>>, %arg13: memref<16x32xf32, #tpu.memory_space<vmem>>, %arg14: memref<16x32xf32, #tpu.memory_space<vmem>>) attributes {dimension_semantics = [#tpu.dimension_semantics<arbitrary>], iteration_bounds = array<i64: 1>, scalar_prefetch = 0 : i64, scratch_operands = 5 : i64, tpu.core_type = #tpu.core_type<tc>, window_params = [{transform_indices = @transform_0, window_bounds = array<i64: 48, 32>}, {transform_indices = @transform_1, window_bounds = array<i64: 48, 32>}, {transform_indices = @transform_2, window_bounds = array<i64: 48, 32>}, {transform_indices = @transform_3, window_bounds = array<i64: 48, 32>}, {transform_indices = @transform_4, window_bounds = array<i64: 48, 32>}, {transform_indices = @transform_5, window_bounds = array<i64: 48, 32>}, {transform_indices = @transform_6, window_bounds = array<i64: 16, 32>}, {transform_indices = @transform_7, window_bounds = array<i64: 16, 32>}, {transform_indices = @transform_8, window_bounds = array<i64: 1, 5>}]} {
    %c0_i32 = arith.constant 0 : i32
    %0 = arith.cmpi eq, %arg0, %c0_i32 : i32
    %1 = arith.extui %0 : i1 to i32
    %c0_i32_0 = arith.constant 0 : i32
    %2 = arith.cmpi ne, %1, %c0_i32_0 : i32
    scf.if %2 {
      %cst_38 = arith.constant 0.000000e+00 : f32
      %43 = vector.broadcast %cst_38 : f32 to vector<48x32xf32>
      %c0_39 = arith.constant 0 : index
      %c0_40 = arith.constant 0 : index
      %44 = vector.load %arg10[%c0_39, %c0_40] : memref<48x32xf32, #tpu.memory_space<vmem>>, vector<48x32xf32>
      tpu.vector_store %arg10[%c0_39, %c0_40], %43 {strides = array<i32>} : memref<48x32xf32, #tpu.memory_space<vmem>>, vector<48x32xf32>,
      %cst_41 = arith.constant 0.000000e+00 : f32
      %45 = vector.broadcast %cst_41 : f32 to vector<48x32xf32>
      %c0_42 = arith.constant 0 : index
      %c0_43 = arith.constant 0 : index
      %46 = vector.load %arg11[%c0_42, %c0_43] : memref<48x32xf32, #tpu.memory_space<vmem>>, vector<48x32xf32>
      tpu.vector_store %arg11[%c0_42, %c0_43], %45 {strides = array<i32>} : memref<48x32xf32, #tpu.memory_space<vmem>>, vector<48x32xf32>,
      %cst_44 = arith.constant 0.000000e+00 : f32
      %47 = vector.broadcast %cst_44 : f32 to vector<48x32xf32>
      %c0_45 = arith.constant 0 : index
      %c0_46 = arith.constant 0 : index
      %48 = vector.load %arg12[%c0_45, %c0_46] : memref<48x32xf32, #tpu.memory_space<vmem>>, vector<48x32xf32>
      tpu.vector_store %arg12[%c0_45, %c0_46], %47 {strides = array<i32>} : memref<48x32xf32, #tpu.memory_space<vmem>>, vector<48x32xf32>,
      %cst_47 = arith.constant 0.000000e+00 : f32
      %49 = vector.broadcast %cst_47 : f32 to vector<16x32xf32>
      %c0_48 = arith.constant 0 : index
      %c0_49 = arith.constant 0 : index
      %50 = vector.load %arg13[%c0_48, %c0_49] : memref<16x32xf32, #tpu.memory_space<vmem>>, vector<16x32xf32>
      tpu.vector_store %arg13[%c0_48, %c0_49], %49 {strides = array<i32>} : memref<16x32xf32, #tpu.memory_space<vmem>>, vector<16x32xf32>,
      %cst_50 = arith.constant 0.000000e+00 : f32
      %51 = vector.broadcast %cst_50 : f32 to vector<16x32xf32>
      %c0_51 = arith.constant 0 : index
      %c0_52 = arith.constant 0 : index
      %52 = vector.load %arg14[%c0_51, %c0_52] : memref<16x32xf32, #tpu.memory_space<vmem>>, vector<16x32xf32>
      tpu.vector_store %arg14[%c0_51, %c0_52], %51 {strides = array<i32>} : memref<16x32xf32, #tpu.memory_space<vmem>>, vector<16x32xf32>,
    } else {
    }
    %c0 = arith.constant 0 : index
    %c0_1 = arith.constant 0 : index
    %3 = vector.load %arg1[%c0, %c0_1] : memref<48x32xf32, #tpu.memory_space<vmem>>, vector<48x32xf32>
    %c0_2 = arith.constant 0 : index
    %c0_3 = arith.constant 0 : index
    %4 = vector.load %arg2[%c0_2, %c0_3] : memref<48x32xf32, #tpu.memory_space<vmem>>, vector<48x32xf32>
    %5 = arith.subf %3, %4 : vector<48x32xf32>
    %6 = math.absf %5 : vector<48x32xf32>
    %c0_4 = arith.constant 0 : index
    %c0_5 = arith.constant 0 : index
    %7 = vector.load %arg10[%c0_4, %c0_5] : memref<48x32xf32, #tpu.memory_space<vmem>>, vector<48x32xf32>
    %8 = arith.addf %7, %6 : vector<48x32xf32>
    %c0_6 = arith.constant 0 : index
    %c0_7 = arith.constant 0 : index
    %9 = vector.load %arg10[%c0_6, %c0_7] : memref<48x32xf32, #tpu.memory_space<vmem>>, vector<48x32xf32>
    tpu.vector_store %arg10[%c0_6, %c0_7], %8 {strides = array<i32>} : memref<48x32xf32, #tpu.memory_space<vmem>>, vector<48x32xf32>,
    %c0_8 = arith.constant 0 : index
    %c0_9 = arith.constant 0 : index
    %10 = vector.load %arg3[%c0_8, %c0_9] : memref<48x32xf32, #tpu.memory_space<vmem>>, vector<48x32xf32>
    %c0_10 = arith.constant 0 : index
    %c0_11 = arith.constant 0 : index
    %11 = vector.load %arg4[%c0_10, %c0_11] : memref<48x32xf32, #tpu.memory_space<vmem>>, vector<48x32xf32>
    %12 = arith.subf %10, %11 : vector<48x32xf32>
    %13 = math.absf %12 : vector<48x32xf32>
    %c0_12 = arith.constant 0 : index
    %c0_13 = arith.constant 0 : index
    %14 = vector.load %arg11[%c0_12, %c0_13] : memref<48x32xf32, #tpu.memory_space<vmem>>, vector<48x32xf32>
    %15 = arith.addf %14, %13 : vector<48x32xf32>
    %c0_14 = arith.constant 0 : index
    %c0_15 = arith.constant 0 : index
    %16 = vector.load %arg11[%c0_14, %c0_15] : memref<48x32xf32, #tpu.memory_space<vmem>>, vector<48x32xf32>
    tpu.vector_store %arg11[%c0_14, %c0_15], %15 {strides = array<i32>} : memref<48x32xf32, #tpu.memory_space<vmem>>, vector<48x32xf32>,
    %c0_16 = arith.constant 0 : index
    %c0_17 = arith.constant 0 : index
    %17 = vector.load %arg5[%c0_16, %c0_17] : memref<48x32xf32, #tpu.memory_space<vmem>>, vector<48x32xf32>
    %c0_18 = arith.constant 0 : index
    %c0_19 = arith.constant 0 : index
    %18 = vector.load %arg6[%c0_18, %c0_19] : memref<48x32xf32, #tpu.memory_space<vmem>>, vector<48x32xf32>
    %19 = arith.subf %17, %18 : vector<48x32xf32>
    %20 = math.absf %19 : vector<48x32xf32>
    %c0_20 = arith.constant 0 : index
    %c0_21 = arith.constant 0 : index
    %21 = vector.load %arg12[%c0_20, %c0_21] : memref<48x32xf32, #tpu.memory_space<vmem>>, vector<48x32xf32>
    %22 = arith.addf %21, %20 : vector<48x32xf32>
    %c0_22 = arith.constant 0 : index
    %c0_23 = arith.constant 0 : index
    %23 = vector.load %arg12[%c0_22, %c0_23] : memref<48x32xf32, #tpu.memory_space<vmem>>, vector<48x32xf32>
    tpu.vector_store %arg12[%c0_22, %c0_23], %22 {strides = array<i32>} : memref<48x32xf32, #tpu.memory_space<vmem>>, vector<48x32xf32>,
    %c0_24 = arith.constant 0 : index
    %c0_25 = arith.constant 0 : index
    %24 = vector.load %arg7[%c0_24, %c0_25] : memref<16x32xf32, #tpu.memory_space<vmem>>, vector<16x32xf32>
    %c0_26 = arith.constant 0 : index
    %c0_27 = arith.constant 0 : index
    %25 = vector.load %arg8[%c0_26, %c0_27] : memref<16x32xf32, #tpu.memory_space<vmem>>, vector<16x32xf32>
    %26 = arith.subf %24, %25 : vector<16x32xf32>
    %27 = math.absf %26 : vector<16x32xf32>
    %cst = arith.constant 1.000000e-01 : f32
    %28 = vector.broadcast %cst : f32 to vector<16x32xf32>
    %29 = arith.mulf %25, %28 : vector<16x32xf32>
    %30 = arith.cmpf ogt, %27, %29 : vector<16x32xf32>
    %31 = arith.extui %30 : vector<16x32xi1> to vector<16x32xi32>
    %32 = arith.sitofp %31 : vector<16x32xi32> to vector<16x32xf32>
    %c0_28 = arith.constant 0 : index
    %c0_29 = arith.constant 0 : index
    %33 = vector.load %arg13[%c0_28, %c0_29] : memref<16x32xf32, #tpu.memory_space<vmem>>, vector<16x32xf32>
    %34 = arith.mulf %27, %32 : vector<16x32xf32>
    %35 = arith.addf %33, %34 : vector<16x32xf32>
    %c0_30 = arith.constant 0 : index
    %c0_31 = arith.constant 0 : index
    %36 = vector.load %arg13[%c0_30, %c0_31] : memref<16x32xf32, #tpu.memory_space<vmem>>, vector<16x32xf32>
    tpu.vector_store %arg13[%c0_30, %c0_31], %35 {strides = array<i32>} : memref<16x32xf32, #tpu.memory_space<vmem>>, vector<16x32xf32>,
    %c0_32 = arith.constant 0 : index
    %c0_33 = arith.constant 0 : index
    %37 = vector.load %arg14[%c0_32, %c0_33] : memref<16x32xf32, #tpu.memory_space<vmem>>, vector<16x32xf32>
    %38 = arith.addf %37, %32 : vector<16x32xf32>
    %c0_34 = arith.constant 0 : index
    %c0_35 = arith.constant 0 : index
    %39 = vector.load %arg14[%c0_34, %c0_35] : memref<16x32xf32, #tpu.memory_space<vmem>>, vector<16x32xf32>
    tpu.vector_store %arg14[%c0_34, %c0_35], %38 {strides = array<i32>} : memref<16x32xf32, #tpu.memory_space<vmem>>, vector<16x32xf32>,
    %c0_i32_36 = arith.constant 0 : i32
    %40 = arith.cmpi eq, %arg0, %c0_i32_36 : i32
    %41 = arith.extui %40 : i1 to i32
    %c0_i32_37 = arith.constant 0 : i32
    %42 = arith.cmpi ne, %41, %c0_i32_37 : i32
    scf.if %42 {
      %c0_38 = arith.constant 0 : index
      %c0_39 = arith.constant 0 : index
      %43 = vector.load %arg10[%c0_38, %c0_39] : memref<48x32xf32, #tpu.memory_space<vmem>>, vector<48x32xf32>
      %44 = vector.shape_cast %43 : vector<48x32xf32> to vector<1x48x32xf32>
      %cst_40 = arith.constant dense<0.000000e+00> : vector<1xf32>
      %45 = vector.multi_reduction <add>, %44, %cst_40 [1, 2] : vector<1x48x32xf32> to vector<1xf32>
      %46 = vector.shape_cast %45 : vector<1xf32> to vector<1x1x1xf32>
      %47 = vector.extract %46[0, 0, 0] : f32 from vector<1x1x1xf32>
      %c0_41 = arith.constant 0 : index
      %c0_42 = arith.constant 0 : index
      %48 = memref.load %arg9[%c0_41, %c0_42] : memref<1x5xf32, #tpu.memory_space<smem>>
      memref.store %47, %arg9[%c0_41, %c0_42] : memref<1x5xf32, #tpu.memory_space<smem>>
      %c0_43 = arith.constant 0 : index
      %c0_44 = arith.constant 0 : index
      %49 = vector.load %arg11[%c0_43, %c0_44] : memref<48x32xf32, #tpu.memory_space<vmem>>, vector<48x32xf32>
      %50 = vector.shape_cast %49 : vector<48x32xf32> to vector<1x48x32xf32>
      %cst_45 = arith.constant dense<0.000000e+00> : vector<1xf32>
      %51 = vector.multi_reduction <add>, %50, %cst_45 [1, 2] : vector<1x48x32xf32> to vector<1xf32>
      %52 = vector.shape_cast %51 : vector<1xf32> to vector<1x1x1xf32>
      %53 = vector.extract %52[0, 0, 0] : f32 from vector<1x1x1xf32>
      %c0_46 = arith.constant 0 : index
      %c1 = arith.constant 1 : index
      %54 = memref.load %arg9[%c0_46, %c1] : memref<1x5xf32, #tpu.memory_space<smem>>
      memref.store %53, %arg9[%c0_46, %c1] : memref<1x5xf32, #tpu.memory_space<smem>>
      %c0_47 = arith.constant 0 : index
      %c0_48 = arith.constant 0 : index
      %55 = vector.load %arg12[%c0_47, %c0_48] : memref<48x32xf32, #tpu.memory_space<vmem>>, vector<48x32xf32>
      %56 = vector.shape_cast %55 : vector<48x32xf32> to vector<1x48x32xf32>
      %cst_49 = arith.constant dense<0.000000e+00> : vector<1xf32>
      %57 = vector.multi_reduction <add>, %56, %cst_49 [1, 2] : vector<1x48x32xf32> to vector<1xf32>
      %58 = vector.shape_cast %57 : vector<1xf32> to vector<1x1x1xf32>
      %59 = vector.extract %58[0, 0, 0] : f32 from vector<1x1x1xf32>
      %c0_50 = arith.constant 0 : index
      %c2 = arith.constant 2 : index
      %60 = memref.load %arg9[%c0_50, %c2] : memref<1x5xf32, #tpu.memory_space<smem>>
      memref.store %59, %arg9[%c0_50, %c2] : memref<1x5xf32, #tpu.memory_space<smem>>
      %c0_51 = arith.constant 0 : index
      %c0_52 = arith.constant 0 : index
      %61 = vector.load %arg13[%c0_51, %c0_52] : memref<16x32xf32, #tpu.memory_space<vmem>>, vector<16x32xf32>
      %62 = vector.shape_cast %61 : vector<16x32xf32> to vector<1x16x32xf32>
      %cst_53 = arith.constant dense<0.000000e+00> : vector<1xf32>
      %63 = vector.multi_reduction <add>, %62, %cst_53 [1, 2] : vector<1x16x32xf32> to vector<1xf32>
      %64 = vector.shape_cast %63 : vector<1xf32> to vector<1x1x1xf32>
      %65 = vector.extract %64[0, 0, 0] : f32 from vector<1x1x1xf32>
      %c0_54 = arith.constant 0 : index
      %c3 = arith.constant 3 : index
      %66 = memref.load %arg9[%c0_54, %c3] : memref<1x5xf32, #tpu.memory_space<smem>>
      memref.store %65, %arg9[%c0_54, %c3] : memref<1x5xf32, #tpu.memory_space<smem>>
      %c0_55 = arith.constant 0 : index
      %c0_56 = arith.constant 0 : index
      %67 = vector.load %arg14[%c0_55, %c0_56] : memref<16x32xf32, #tpu.memory_space<vmem>>, vector<16x32xf32>
      %68 = vector.shape_cast %67 : vector<16x32xf32> to vector<1x16x32xf32>
      %cst_57 = arith.constant dense<0.000000e+00> : vector<1xf32>
      %69 = vector.multi_reduction <add>, %68, %cst_57 [1, 2] : vector<1x16x32xf32> to vector<1xf32>
      %70 = vector.shape_cast %69 : vector<1xf32> to vector<1x1x1xf32>
      %71 = vector.extract %70[0, 0, 0] : f32 from vector<1x1x1xf32>
      %c0_58 = arith.constant 0 : index
      %c4 = arith.constant 4 : index
      %72 = memref.load %arg9[%c0_58, %c4] : memref<1x5xf32, #tpu.memory_space<smem>>
      memref.store %71, %arg9[%c0_58, %c4] : memref<1x5xf32, #tpu.memory_space<smem>>
    } else {
    }
    return
  }
  func.func @transform_0(%arg0: i32) -> (i32, i32) {
    %c0_i32 = arith.constant 0 : i32
    %c0_i32_0 = arith.constant 0 : i32
    return %c0_i32, %arg0 : i32, i32
  }
  func.func @transform_1(%arg0: i32) -> (i32, i32) {
    %c0_i32 = arith.constant 0 : i32
    %c0_i32_0 = arith.constant 0 : i32
    return %c0_i32, %arg0 : i32, i32
  }
  func.func @transform_2(%arg0: i32) -> (i32, i32) {
    %c0_i32 = arith.constant 0 : i32
    %c0_i32_0 = arith.constant 0 : i32
    return %c0_i32, %arg0 : i32, i32
  }
  func.func @transform_3(%arg0: i32) -> (i32, i32) {
    %c0_i32 = arith.constant 0 : i32
    %c0_i32_0 = arith.constant 0 : i32
    return %c0_i32, %arg0 : i32, i32
  }
  func.func @transform_4(%arg0: i32) -> (i32, i32) {
    %c0_i32 = arith.constant 0 : i32
    %c0_i32_0 = arith.constant 0 : i32
    return %c0_i32, %arg0 : i32, i32
  }
  func.func @transform_5(%arg0: i32) -> (i32, i32) {
    %c0_i32 = arith.constant 0 : i32
    %c0_i32_0 = arith.constant 0 : i32
    return %c0_i32, %arg0 : i32, i32
  }
  func.func @transform_6(%arg0: i32) -> (i32, i32) {
    %c0_i32 = arith.constant 0 : i32
    %c0_i32_0 = arith.constant 0 : i32
    return %c0_i32, %arg0 : i32, i32
  }
  func.func @transform_7(%arg0: i32) -> (i32, i32) {
    %c0_i32 = arith.constant 0 : i32
    %c0_i32_0 = arith.constant 0 : i32
    return %c0_i32, %arg0 : i32, i32
  }
  func.func @transform_8(%arg0: i32) -> (i32, i32) {
    %c0_i32 = arith.constant 0 : i32
    %c0_i32_0 = arith.constant 0 : i32
    %c0_i32_1 = arith.constant 0 : i32
    return %c0_i32, %c0_i32_0 : i32, i32
  }
}

</mosaic_0001>

<llo_original>
// kernel: tpu_custom_call.1
$region0: #{tpu_custom_call.1}
  #allocation0 [shape = 'u32[]', space=smem, size = 0x4, offset = 0x4, fixed_abs, tag = 'smem constant byte address 0x4 - core index']
  #allocation1 [shape = 'u32[144,128]{1,0:T(1,128)}', space=vmem, size = 0x12000, scoped, tag = 'internal scratch']
  #allocation2 [shape = 'f32[48,32]{1,0:T(8,128)}', space=vmem, size = 0x6000, scoped, tag = 'scratch operand']
  #allocation3 [shape = 'f32[48,32]{1,0:T(8,128)}', space=vmem, size = 0x6000, scoped, tag = 'scratch operand']
  #allocation4 [shape = 'f32[48,32]{1,0:T(8,128)}', space=vmem, size = 0x6000, scoped, tag = 'scratch operand']
  #allocation5 [shape = 'f32[16,32]{1,0:T(8,128)}', space=vmem, size = 0x2000, scoped, tag = 'scratch operand']
  #allocation6 [shape = 'f32[16,32]{1,0:T(8,128)}', space=vmem, size = 0x2000, scoped, tag = 'scratch operand']
  %s0 = inlined_call_operand.vmem [shape: f32[48,32], index: 0, kind: input, shape index: {}]
  %s1 = inlined_call_operand.vmem [shape: f32[48,32], index: 1, kind: input, shape index: {}]
  %s2 = inlined_call_operand.vmem [shape: f32[48,32], index: 2, kind: input, shape index: {}]
  %s3 = inlined_call_operand.vmem [shape: f32[48,32], index: 3, kind: input, shape index: {}]
  %s4 = inlined_call_operand.vmem [shape: f32[48,32], index: 4, kind: input, shape index: {}]
  %s5 = inlined_call_operand.vmem [shape: f32[48,32], index: 5, kind: input, shape index: {}]
  %s6 = inlined_call_operand.vmem [shape: f32[16,32], index: 6, kind: input, shape index: {}]
  %s7 = inlined_call_operand.vmem [shape: f32[16,32], index: 7, kind: input, shape index: {}]
  %s8 = inlined_call_operand.hbm [shape: f32[1,5], index: 8, kind: output, shape index: {}]
  %s9 = sld [smem:[#allocation0]]
  $region50: #{tpu_custom_call.1} parent=0
    _
  %s11 = ssub.s32 1, %s9
  %s12 = scalar_select 0, %s11, %s9
  $region1: #{tpu_custom_call.1} parent=0
    #allocation7 [shape = 'u8[512]{0}', space=smem, size = 0x200, scoped, tag = 'output window, operand 0, single buffered']
    #allocation8 [shape = 's32[1]{0}', space=sflag, size = 0x4, scoped, tag = 'scoped memory for tpu_custom_call.1']
    %13 = vsyncpa [#allocation8], 0
    // Predicated region
    $region2: #{tpu_custom_call.1} parent=1 // pred_check
      _
    $region3: #{tpu_custom_call.1} parent=1 // pred_check_branch
      %15 = sbr.rel (0) target = $region5
    $region4: #{tpu_custom_call.1} parent=1 // pred_region
      _
    $region5: #{tpu_custom_call.1} parent=1 // pred_fallthru
      _
    // Predicated region
    $region6: #{tpu_custom_call.1} parent=1 // pred_check
      _
    $region7: #{tpu_custom_call.1} parent=1 // pred_check_branch
      %17 = sbr.rel (0) target = $region9
    $region8: #{tpu_custom_call.1} parent=1 // pred_region
      _
    $region9: #{tpu_custom_call.1} parent=1 // pred_fallthru
      _
    // Predicated region
    $region10: #{tpu_custom_call.1} parent=1 // pred_check
      _
    $region11: #{tpu_custom_call.1} parent=1 // pred_check_branch
      %19 = sbr.rel (0) target = $region13
    $region12: #{tpu_custom_call.1} parent=1 // pred_region
      _
    $region13: #{tpu_custom_call.1} parent=1 // pred_fallthru
      _
    // Predicated region
    $region14: #{tpu_custom_call.1} parent=1 // pred_check
      _
    $region15: #{tpu_custom_call.1} parent=1 // pred_check_branch
      %21 = sbr.rel (0) target = $region17
    $region16: #{tpu_custom_call.1} parent=1 // pred_region
      _
    $region17: #{tpu_custom_call.1} parent=1 // pred_fallthru
      _
    // Predicated region
    $region18: #{tpu_custom_call.1} parent=1 // pred_check
      _
    $region19: #{tpu_custom_call.1} parent=1 // pred_check_branch
      %23 = sbr.rel (0) target = $region21
    $region20: #{tpu_custom_call.1} parent=1 // pred_region
      _
    $region21: #{tpu_custom_call.1} parent=1 // pred_fallthru
      _
    // Predicated region
    $region22: #{tpu_custom_call.1} parent=1 // pred_check
      _
    $region23: #{tpu_custom_call.1} parent=1 // pred_check_branch
      %25 = sbr.rel (0) target = $region25
    $region24: #{tpu_custom_call.1} parent=1 // pred_region
      _
    $region25: #{tpu_custom_call.1} parent=1 // pred_fallthru
      _
    // Predicated region
    $region26: #{tpu_custom_call.1} parent=1 // pred_check
      _
    $region27: #{tpu_custom_call.1} parent=1 // pred_check_branch
      %27 = sbr.rel (0) target = $region29
    $region28: #{tpu_custom_call.1} parent=1 // pred_region
      _
    $region29: #{tpu_custom_call.1} parent=1 // pred_fallthru
      _
    // Predicated region
    $region30: #{tpu_custom_call.1} parent=1 // pred_check
      _
    $region31: #{tpu_custom_call.1} parent=1 // pred_check_branch
      %29 = sbr.rel (0) target = $region33
    $region32: #{tpu_custom_call.1} parent=1 // pred_region
      _
    $region33: #{tpu_custom_call.1} parent=1 // pred_fallthru
      _
    %p30 = scmp.eq.s32.totalorder 0, 0
    // Predicated region
    $region34: #{tpu_custom_call.1} parent=1 // pred_check
      %p31 = pneg %p30
    $region35: #{tpu_custom_call.1} parent=1 // pred_check_branch
      %33 = sbr.rel (%p31) target = $region37
    $region36: #{tpu_custom_call.1} parent=1 // pred_region
      %vm34 = vcmask 261120
      %35 = vst.msk [vmem:[#allocation2] sm:$0xff] %vm34, 0.0
      %36 = vst.msk [vmem:[#allocation2 + $0x8] sm:$0xff] %vm34, 0.0
      %37 = vst.msk [vmem:[#allocation2 + $0x10] sm:$0xff] %vm34, 0.0
      %38 = vst.msk [vmem:[#allocation2 + $0x18] sm:$0xff] %vm34, 0.0
      %39 = vst.msk [vmem:[#allocation2 + $0x20] sm:$0xff] %vm34, 0.0
      %40 = vst.msk [vmem:[#allocation2 + $0x28] sm:$0xff] %vm34, 0.0
      %41 = vst.msk [vmem:[#allocation3] sm:$0xff] %vm34, 0.0
      %42 = vst.msk [vmem:[#allocation3 + $0x8] sm:$0xff] %vm34, 0.0
      %43 = vst.msk [vmem:[#allocation3 + $0x10] sm:$0xff] %vm34, 0.0
      %44 = vst.msk [vmem:[#allocation3 + $0x18] sm:$0xff] %vm34, 0.0
      %45 = vst.msk [vmem:[#allocation3 + $0x20] sm:$0xff] %vm34, 0.0
      %46 = vst.msk [vmem:[#allocation3 + $0x28] sm:$0xff] %vm34, 0.0
      %47 = vst.msk [vmem:[#allocation4] sm:$0xff] %vm34, 0.0
      %48 = vst.msk [vmem:[#allocation4 + $0x8] sm:$0xff] %vm34, 0.0
      %49 = vst.msk [vmem:[#allocation4 + $0x10] sm:$0xff] %vm34, 0.0
      %50 = vst.msk [vmem:[#allocation4 + $0x18] sm:$0xff] %vm34, 0.0
      %51 = vst.msk [vmem:[#allocation4 + $0x20] sm:$0xff] %vm34, 0.0
      %52 = vst.msk [vmem:[#allocation4 + $0x28] sm:$0xff] %vm34, 0.0
      %53 = vst.msk [vmem:[#allocation5] sm:$0xff] %vm34, 0.0
      %54 = vst.msk [vmem:[#allocation5 + $0x8] sm:$0xff] %vm34, 0.0
      %55 = vst.msk [vmem:[#allocation6] sm:$0xff] %vm34, 0.0
      %56 = vst.msk [vmem:[#allocation6 + $0x8] sm:$0xff] %vm34, 0.0
    $region37: #{tpu_custom_call.1} parent=1 // pred_fallthru
      _
    %v57 = vld [vmem:[%s0] sm:$0xff]
    %v58 = vld [vmem:[%s0 + $0x8] sm:$0xff]
    %v59 = vld [vmem:[%s0 + $0x10] sm:$0xff]
    %v60 = vld [vmem:[%s0 + $0x18] sm:$0xff]
    %v61 = vld [vmem:[%s0 + $0x20] sm:$0xff]
    %v62 = vld [vmem:[%s0 + $0x28] sm:$0xff]
    %v63 = vld [vmem:[%s1] sm:$0xff]
    %v64 = vld [vmem:[%s1 + $0x8] sm:$0xff]
    %v65 = vld [vmem:[%s1 + $0x10] sm:$0xff]
    %v66 = vld [vmem:[%s1 + $0x18] sm:$0xff]
    %v67 = vld [vmem:[%s1 + $0x20] sm:$0xff]
    %v68 = vld [vmem:[%s1 + $0x28] sm:$0xff]
    %v69 = vsub.f32 %v57, %v63
    %v70 = vsub.f32 %v58, %v64
    %v71 = vsub.f32 %v59, %v65
    %v72 = vsub.f32 %v60, %v66
    %v73 = vsub.f32 %v61, %v67
    %v74 = vsub.f32 %v62, %v68
    %v75 = vand.u32 2147483647, %v69
    %v76 = vand.u32 2147483647, %v70
    %v77 = vand.u32 2147483647, %v71
    %v78 = vand.u32 2147483647, %v72
    %v79 = vand.u32 2147483647, %v73
    %v80 = vand.u32 2147483647, %v74
    %v81 = vld [vmem:[#allocation2] sm:$0xff]
    %v82 = vld [vmem:[#allocation2 + $0x8] sm:$0xff]
    %v83 = vld [vmem:[#allocation2 + $0x10] sm:$0xff]
    %v84 = vld [vmem:[#allocation2 + $0x18] sm:$0xff]
    %v85 = vld [vmem:[#allocation2 + $0x20] sm:$0xff]
    %v86 = vld [vmem:[#allocation2 + $0x28] sm:$0xff]
    %v87 = vadd.f32 %v81, %v75
    %v88 = vadd.f32 %v82, %v76
    %v89 = vadd.f32 %v83, %v77
    %v90 = vadd.f32 %v84, %v78
    %v91 = vadd.f32 %v85, %v79
    %v92 = vadd.f32 %v86, %v80
    %vm93 = vcmask 261120
    %94 = vst.msk [vmem:[#allocation2] sm:$0xff] %vm93, %v87
    %95 = vst.msk [vmem:[#allocation2 + $0x8] sm:$0xff] %vm93, %v88
    %96 = vst.msk [vmem:[#allocation2 + $0x10] sm:$0xff] %vm93, %v89
    %97 = vst.msk [vmem:[#allocation2 + $0x18] sm:$0xff] %vm93, %v90
    %98 = vst.msk [vmem:[#allocation2 + $0x20] sm:$0xff] %vm93, %v91
    %99 = vst.msk [vmem:[#allocation2 + $0x28] sm:$0xff] %vm93, %v92
    %v100 = vld [vmem:[%s2] sm:$0xff]
    %v101 = vld [vmem:[%s2 + $0x8] sm:$0xff]
    %v102 = vld [vmem:[%s2 + $0x10] sm:$0xff]
    %v103 = vld [vmem:[%s2 + $0x18] sm:$0xff]
    %v104 = vld [vmem:[%s2 + $0x20] sm:$0xff]
    %v105 = vld [vmem:[%s2 + $0x28] sm:$0xff]
    %v106 = vld [vmem:[%s3] sm:$0xff]
    %v107 = vld [vmem:[%s3 + $0x8] sm:$0xff]
    %v108 = vld [vmem:[%s3 + $0x10] sm:$0xff]
    %v109 = vld [vmem:[%s3 + $0x18] sm:$0xff]
    %v110 = vld [vmem:[%s3 + $0x20] sm:$0xff]
    %v111 = vld [vmem:[%s3 + $0x28] sm:$0xff]
    %v112 = vsub.f32 %v100, %v106
    %v113 = vsub.f32 %v101, %v107
    %v114 = vsub.f32 %v102, %v108
    %v115 = vsub.f32 %v103, %v109
    %v116 = vsub.f32 %v104, %v110
    %v117 = vsub.f32 %v105, %v111
    %v118 = vand.u32 2147483647, %v112
    %v119 = vand.u32 2147483647, %v113
    %v120 = vand.u32 2147483647, %v114
    %v121 = vand.u32 2147483647, %v115
    %v122 = vand.u32 2147483647, %v116
    %v123 = vand.u32 2147483647, %v117
    %v124 = vld [vmem:[#allocation3] sm:$0xff]
    %v125 = vld [vmem:[#allocation3 + $0x8] sm:$0xff]
    %v126 = vld [vmem:[#allocation3 + $0x10] sm:$0xff]
    %v127 = vld [vmem:[#allocation3 + $0x18] sm:$0xff]
    %v128 = vld [vmem:[#allocation3 + $0x20] sm:$0xff]
    %v129 = vld [vmem:[#allocation3 + $0x28] sm:$0xff]
    %v130 = vadd.f32 %v124, %v118
    %v131 = vadd.f32 %v125, %v119
    %v132 = vadd.f32 %v126, %v120
    %v133 = vadd.f32 %v127, %v121
    %v134 = vadd.f32 %v128, %v122
    %v135 = vadd.f32 %v129, %v123
    %136 = vst.msk [vmem:[#allocation3] sm:$0xff] %vm93, %v130
    %137 = vst.msk [vmem:[#allocation3 + $0x8] sm:$0xff] %vm93, %v131
    %138 = vst.msk [vmem:[#allocation3 + $0x10] sm:$0xff] %vm93, %v132
    %139 = vst.msk [vmem:[#allocation3 + $0x18] sm:$0xff] %vm93, %v133
    %140 = vst.msk [vmem:[#allocation3 + $0x20] sm:$0xff] %vm93, %v134
    %141 = vst.msk [vmem:[#allocation3 + $0x28] sm:$0xff] %vm93, %v135
    %v142 = vld [vmem:[%s4] sm:$0xff]
    %v143 = vld [vmem:[%s4 + $0x8] sm:$0xff]
    %v144 = vld [vmem:[%s4 + $0x10] sm:$0xff]
    %v145 = vld [vmem:[%s4 + $0x18] sm:$0xff]
    %v146 = vld [vmem:[%s4 + $0x20] sm:$0xff]
    %v147 = vld [vmem:[%s4 + $0x28] sm:$0xff]
    %v148 = vld [vmem:[%s5] sm:$0xff]
    %v149 = vld [vmem:[%s5 + $0x8] sm:$0xff]
    %v150 = vld [vmem:[%s5 + $0x10] sm:$0xff]
    %v151 = vld [vmem:[%s5 + $0x18] sm:$0xff]
    %v152 = vld [vmem:[%s5 + $0x20] sm:$0xff]
    %v153 = vld [vmem:[%s5 + $0x28] sm:$0xff]
    %v154 = vsub.f32 %v142, %v148
    %v155 = vsub.f32 %v143, %v149
    %v156 = vsub.f32 %v144, %v150
    %v157 = vsub.f32 %v145, %v151
    %v158 = vsub.f32 %v146, %v152
    %v159 = vsub.f32 %v147, %v153
    %v160 = vand.u32 2147483647, %v154
    %v161 = vand.u32 2147483647, %v155
    %v162 = vand.u32 2147483647, %v156
    %v163 = vand.u32 2147483647, %v157
    %v164 = vand.u32 2147483647, %v158
    %v165 = vand.u32 2147483647, %v159
    %v166 = vld [vmem:[#allocation4] sm:$0xff]
    %v167 = vld [vmem:[#allocation4 + $0x8] sm:$0xff]
    %v168 = vld [vmem:[#allocation4 + $0x10] sm:$0xff]
    %v169 = vld [vmem:[#allocation4 + $0x18] sm:$0xff]
    %v170 = vld [vmem:[#allocation4 + $0x20] sm:$0xff]
    %v171 = vld [vmem:[#allocation4 + $0x28] sm:$0xff]
    %v172 = vadd.f32 %v166, %v160
    %v173 = vadd.f32 %v167, %v161
    %v174 = vadd.f32 %v168, %v162
    %v175 = vadd.f32 %v169, %v163
    %v176 = vadd.f32 %v170, %v164
    %v177 = vadd.f32 %v171, %v165
    %178 = vst.msk [vmem:[#allocation4] sm:$0xff] %vm93, %v172
    %179 = vst.msk [vmem:[#allocation4 + $0x8] sm:$0xff] %vm93, %v173
    %180 = vst.msk [vmem:[#allocation4 + $0x10] sm:$0xff] %vm93, %v174
    %181 = vst.msk [vmem:[#allocation4 + $0x18] sm:$0xff] %vm93, %v175
    %182 = vst.msk [vmem:[#allocation4 + $0x20] sm:$0xff] %vm93, %v176
    %183 = vst.msk [vmem:[#allocation4 + $0x28] sm:$0xff] %vm93, %v177
    %v184 = vld [vmem:[%s6] sm:$0xff]
    %v185 = vld [vmem:[%s6 + $0x8] sm:$0xff]
    %v186 = vld [vmem:[%s7] sm:$0xff]
    %v187 = vld [vmem:[%s7 + $0x8] sm:$0xff]
    %v188 = vsub.f32 %v184, %v186
    %v189 = vsub.f32 %v185, %v187
    %v190 = vand.u32 2147483647, %v188
    %v191 = vand.u32 2147483647, %v189
    %v192 = vmul.f32 %v186, 0.1
    %v193 = vmul.f32 %v187, 0.1
    %vm194 = vcmp.gt.f32.partialorder %v190, %v192
    %vm195 = vcmp.gt.f32.partialorder %v191, %v193
    %v196 = vsel %vm194, 1, 0
    %v197 = vsel %vm195, 1, 0
    %v198 = vcvt.s32.f32 %v196
    %v199 = vcvt.s32.f32 %v197
    %v200 = vld [vmem:[#allocation5] sm:$0xff]
    %v201 = vld [vmem:[#allocation5 + $0x8] sm:$0xff]
    %v202 = vmul.f32 %v190, %v198
    %v203 = vmul.f32 %v191, %v199
    %v204 = vadd.f32 %v200, %v202
    %v205 = vadd.f32 %v201, %v203
    %206 = vst.msk [vmem:[#allocation5] sm:$0xff] %vm93, %v204
    %207 = vst.msk [vmem:[#allocation5 + $0x8] sm:$0xff] %vm93, %v205
    %v208 = vld [vmem:[#allocation6] sm:$0xff]
    %v209 = vld [vmem:[#allocation6 + $0x8] sm:$0xff]
    %v210 = vadd.f32 %v208, %v198
    %v211 = vadd.f32 %v209, %v199
    %212 = vst.msk [vmem:[#allocation6] sm:$0xff] %vm93, %v210
    %213 = vst.msk [vmem:[#allocation6 + $0x8] sm:$0xff] %vm93, %v211
    // Predicated region
    $region38: #{tpu_custom_call.1} parent=1 // pred_check
      %p214 = pneg %p30
    $region39: #{tpu_custom_call.1} parent=1 // pred_check_branch
      %216 = sbr.rel (%p214) target = $region41
    $region40: #{tpu_custom_call.1} parent=1 // pred_region
      %v217 = vld [vmem:[#allocation2] sm:$0xff]
      %v218 = vld [vmem:[#allocation2 + $0x8] sm:$0xff]
      %v219 = vld [vmem:[#allocation2 + $0x10] sm:$0xff]
      %v220 = vld [vmem:[#allocation2 + $0x18] sm:$0xff]
      %v221 = vld [vmem:[#allocation2 + $0x20] sm:$0xff]
      %v222 = vld [vmem:[#allocation2 + $0x28] sm:$0xff]
      %v223 = vsel %vm93, %v217, 0.0
      %v224 = vsel %vm93, %v218, 0.0
      %v225 = vadd.f32 %v223, %v224
      %v226 = vsel %vm93, %v219, 0.0
      %v227 = vadd.f32 %v225, %v226
      %v228 = vsel %vm93, %v220, 0.0
      %v229 = vadd.f32 %v227, %v228
      %v230 = vsel %vm93, %v221, 0.0
      %v231 = vadd.f32 %v229, %v230
      %v232 = vsel %vm93, %v222, 0.0
      %v233 = vadd.f32 %v231, %v232
      %234 = vadd.xlane.f32.xlu0 %v233
      %v235 = vpop.xlane.xlu0 %234
      %v236 = vrot.slane %v235, 4
      %v237 = vadd.f32 %v235, %v236
      %v238 = vrot.slane %v237, 2
      %v239 = vadd.f32 %v237, %v238
      %v240 = vrot.slane %v239, 1
      %v241 = vadd.f32 %v239, %v240
      %s242 = vtos %v241
      %s243 = scalar_lea.smem [#allocation7], 0
      %244 = sst [smem:[%s243]] %s242
      %v245 = vld [vmem:[#allocation3] sm:$0xff]
      %v246 = vld [vmem:[#allocation3 + $0x8] sm:$0xff]
      %v247 = vld [vmem:[#allocation3 + $0x10] sm:$0xff]
      %v248 = vld [vmem:[#allocation3 + $0x18] sm:$0xff]
      %v249 = vld [vmem:[#allocation3 + $0x20] sm:$0xff]
      %v250 = vld [vmem:[#allocation3 + $0x28] sm:$0xff]
      %v251 = vsel %vm93, %v245, 0.0
      %v252 = vsel %vm93, %v246, 0.0
      %v253 = vadd.f32 %v251, %v252
      %v254 = vsel %vm93, %v247, 0.0
      %v255 = vadd.f32 %v253, %v254
      %v256 = vsel %vm93, %v248, 0.0
      %v257 = vadd.f32 %v255, %v256
      %v258 = vsel %vm93, %v249, 0.0
      %v259 = vadd.f32 %v257, %v258
      %v260 = vsel %vm93, %v250, 0.0
      %v261 = vadd.f32 %v259, %v260
      %262 = vadd.xlane.f32.xlu0 %v261
      %v263 = vpop.xlane.xlu0 %262
      %v264 = vrot.slane %v263, 4
      %v265 = vadd.f32 %v263, %v264
      %v266 = vrot.slane %v265, 2
      %v267 = vadd.f32 %v265, %v266
      %v268 = vrot.slane %v267, 1
      %v269 = vadd.f32 %v267, %v268
      %s270 = vtos %v269
      %s271 = scalar_lea.smem [#allocation7], 1
      %272 = sst [smem:[%s271]] %s270
      %v273 = vld [vmem:[#allocation4] sm:$0xff]
      %v274 = vld [vmem:[#allocation4 + $0x8] sm:$0xff]
      %v275 = vld [vmem:[#allocation4 + $0x10] sm:$0xff]
      %v276 = vld [vmem:[#allocation4 + $0x18] sm:$0xff]
      %v277 = vld [vmem:[#allocation4 + $0x20] sm:$0xff]
      %v278 = vld [vmem:[#allocation4 + $0x28] sm:$0xff]
      %v279 = vsel %vm93, %v273, 0.0
      %v280 = vsel %vm93, %v274, 0.0
      %v281 = vadd.f32 %v279, %v280
      %v282 = vsel %vm93, %v275, 0.0
      %v283 = vadd.f32 %v281, %v282
      %v284 = vsel %vm93, %v276, 0.0
      %v285 = vadd.f32 %v283, %v284
      %v286 = vsel %vm93, %v277, 0.0
      %v287 = vadd.f32 %v285, %v286
      %v288 = vsel %vm93, %v278, 0.0
      %v289 = vadd.f32 %v287, %v288
      %290 = vadd.xlane.f32.xlu0 %v289
      %v291 = vpop.xlane.xlu0 %290
      %v292 = vrot.slane %v291, 4
      %v293 = vadd.f32 %v291, %v292
      %v294 = vrot.slane %v293, 2
      %v295 = vadd.f32 %v293, %v294
      %v296 = vrot.slane %v295, 1
      %v297 = vadd.f32 %v295, %v296
      %s298 = vtos %v297
      %s299 = scalar_lea.smem [#allocation7], 2
      %300 = sst [smem:[%s299]] %s298
      %v301 = vld [vmem:[#allocation5] sm:$0xff]
      %v302 = vld [vmem:[#allocation5 + $0x8] sm:$0xff]
      %v303 = vsel %vm93, %v301, 0.0
      %v304 = vsel %vm93, %v302, 0.0
      %v305 = vadd.f32 %v303, %v304
      %306 = vadd.xlane.f32.xlu0 %v305
      %v307 = vpop.xlane.xlu0 %306
      %v308 = vrot.slane %v307, 4
      %v309 = vadd.f32 %v307, %v308
      %v310 = vrot.slane %v309, 2
      %v311 = vadd.f32 %v309, %v310
      %v312 = vrot.slane %v311, 1
      %v313 = vadd.f32 %v311, %v312
      %s314 = vtos %v313
      %s315 = scalar_lea.smem [#allocation7], 3
      %316 = sst [smem:[%s315]] %s314
      %v317 = vld [vmem:[#allocation6] sm:$0xff]
      %v318 = vld [vmem:[#allocation6 + $0x8] sm:$0xff]
      %v319 = vsel %vm93, %v317, 0.0
      %v320 = vsel %vm93, %v318, 0.0
      %v321 = vadd.f32 %v319, %v320
      %322 = vadd.xlane.f32.xlu0 %v321
      %v323 = vpop.xlane.xlu0 %322
      %v324 = vrot.slane %v323, 4
      %v325 = vadd.f32 %v323, %v324
      %v326 = vrot.slane %v325, 2
      %v327 = vadd.f32 %v325, %v326
      %v328 = vrot.slane %v327, 1
      %v329 = vadd.f32 %v327, %v328
      %s330 = vtos %v329
      %s331 = scalar_lea.smem [#allocation7], 4
      %332 = sst [smem:[%s331]] %s330
    $region41: #{tpu_custom_call.1} parent=1 // pred_fallthru
      _
    // Predicated region
    $region42: #{tpu_custom_call.1} parent=1 // pred_check
      _
    $region43: #{tpu_custom_call.1} parent=1 // pred_check_branch
      %334 = sbr.rel (0) target = $region45
    $region44: #{tpu_custom_call.1} parent=1 // pred_region
      %s336 = ssub.s32 16, 16
      %337 = vsyncadd [#allocation8], %s336
      %340 = dma.smem_to_hbm [#allocation7], 16, %s8, [#allocation8]
    $region45: #{tpu_custom_call.1} parent=1 // pred_fallthru
      _
    // Predicated region
    $region46: #{tpu_custom_call.1} parent=1 // pred_check
      _
    $region47: #{tpu_custom_call.1} parent=1 // pred_check_branch
      %342 = sbr.rel (0) target = $region49
    $region48: #{tpu_custom_call.1} parent=1 // pred_region
      %343 = dma.done [#allocation8], 16
    $region49: #{tpu_custom_call.1} parent=1 // pred_fallthru
      _
    %344 = sfence
    %345 = vsyncpa [#allocation8], 1

</llo_original>
